<compile_context>
chip_gen: v7x
topology: tpu7x:2x2x1
jax: 0.10.0
libtpu: 0.0.40
codegen_flags: <defaults>
</compile_context>

<pallas_src>
import functools
from typing import NamedTuple

import jax
import jax.numpy as jnp
from jax.experimental import pallas as pl
from jax.experimental.pallas import tpu as pltpu


# --------------------------------------------------------------------------- helpers
def _round_up(x, m):
    return (x + m - 1) // m * m


def _cdiv(a, b):
    return -(-a // b)


def _largest_divisor_tile(total, candidates):
    for c in candidates:
        if c <= total and total % c == 0:
            return c
    return total


def _pick_k_chunk(k_block, pref=512):
    for c in (pref, 256, 128):
        if c <= k_block and k_block % c == 0:
            return c
    return k_block


def _pick_tm(m, tm_max):
    """M-adaptive, padding-aware tm (multiple of 16 for bf16 sublane packing)."""
    if m <= tm_max:
        return min(_round_up(m, 16), tm_max)
    n_steps = _cdiv(m, tm_max)          # minimal number of weight re-streams
    return min(_round_up(_cdiv(m, n_steps), 16), tm_max)


def _tpu_vmem_capacity_bytes():
    try:
        cap = getattr(pltpu.get_tpu_info(), "vmem_capacity_bytes", None)
        if cap:
            return int(cap)
    except Exception:
        pass
    return 64 * 1024 * 1024  # conservative fallback (v7x per-TensorCore VMEM)


def _fused_vmem_bytes(tm, tn, kp, x_bytes, k_chunk):
    return (2 * tm * kp * x_bytes      # activations, double-buffered
            + 2 * kp * tn              # int8 weights, double-buffered
            + 2 * tn * 2               # scales
            + 2 * tm * tn * x_bytes    # output, double-buffered
            + 2 * tm * tn * 4          # f32 accumulator + epilogue temp
            + k_chunk * tn * x_bytes)  # dequant slab


def _kred_vmem_bytes(tm, tn, tk, x_bytes, k_chunk):
    return (2 * tm * tk * x_bytes
            + 2 * tk * tn
            + 2 * tn * 2
            + 2 * tm * tn * x_bytes
            + 2 * tm * tn * 4          # f32 accumulator scratch + temp
            + k_chunk * tn * x_bytes)


# --------------------------------------------------------------------------- kernels
def _dequant_matmul_f32(x_ref, w_ref, k_chunk):
    """x_ref (tm, Kb) activations, w_ref (Kb, tn) int8 -> (tm, tn) f32.

    Dequantizes one K slab at a time (static, 128-aligned slices) so the full bf16
    weight tile never materializes in VMEM and the cast interleaves with MXU pushes.
    """
    kb = w_ref.shape[0]
    n_chunks = kb // k_chunk
    if n_chunks <= 1:
        w = w_ref[...].astype(x_ref.dtype)  # matches PyTorch weight.to(input.dtype)
        return jnp.dot(x_ref[...], w, preferred_element_type=jnp.float32)
    acc = jnp.zeros((x_ref.shape[0], w_ref.shape[1]), jnp.float32)
    for c in range(n_chunks):  # static slices -> zero-cost views
        lo = c * k_chunk
        w = w_ref[lo:lo + k_chunk, :].astype(x_ref.dtype)
        acc = acc + jnp.dot(x_ref[:, lo:lo + k_chunk], w,
                            preferred_element_type=jnp.float32)
    return acc


def _int8_linear_fused_kernel(x_ref, w_ref, s_ref, o_ref, *, k_chunk):
    """Single-shot path (no K grid axis).

    x_ref : (tm, Kp) activations, w_ref : (Kp, tn) int8 [K,N] layout,
    s_ref : (1, tn) bf16 scales, o_ref : (tm, tn) output.
    """
    acc = _dequant_matmul_f32(x_ref, w_ref, k_chunk)
    o_ref[...] = (acc * s_ref[...].astype(jnp.float32)).astype(o_ref.dtype)


def _int8_linear_kred_kernel(x_ref, w_ref, s_ref, o_ref, acc_ref, *, k_chunk):
    """K-reduction path for K tiles that do not fit the fused VMEM budget."""
    k = pl.program_id(2)

    @pl.when(k == 0)
    def _():
        acc_ref[...] = jnp.zeros_like(acc_ref)

    acc_ref[...] += _dequant_matmul_f32(x_ref, w_ref, k_chunk)

    @pl.when(k == pl.num_programs(2) - 1)
    def _():
        o_ref[...] = (acc_ref[...] * s_ref[...].astype(jnp.float32)).astype(o_ref.dtype)


# --------------------------------------------------------------------------- wrapper
class PreparedInt8Weight(NamedTuple):
    w_kn: jax.Array        # [Kp, Np] int8 — transposed + zero-padded ONCE at load time
    scales_row: jax.Array  # [1, Np] bf16
    out_features: int
    in_features: int


def prepare_weight_only_int8(weight_int8, scales):
    """One-time (model-load) weight prep: [N, K] int8 -> canonical [Kp, Np] layout."""
    n, k = weight_int8.shape
    assert scales.shape == (n,), scales.shape
    kp = _round_up(k, 128)
    np_ = _round_up(n, 128)
    w_kn = weight_int8.T
    if (kp, np_) != (k, n):
        w_kn = jnp.pad(w_kn, ((0, kp - k), (0, np_ - n)))
    s = scales.reshape(1, n)
    if np_ != n:
        s = jnp.pad(s, ((0, 0), (0, np_ - n)))
    return PreparedInt8Weight(jnp.asarray(w_kn), jnp.asarray(s), n, k)


def weight_only_int8_linear(x, prepared: PreparedInt8Weight, *, tn_max=512,
                            tk_max=2048, k_fuse_max=8192, k_chunk_pref=512):
    """out = (x @ W_int8.T) * scales, with W pre-prepared by prepare_weight_only_int8."""
    w_kn, scales_row, n_features, k_features = prepared
    kp, np_ = w_kn.shape
    *lead, kx = x.shape
    assert kx == k_features, (kx, k_features)

    x2 = x.reshape(-1, k_features)
    m = x2.shape[0]
    out_dtype = x.dtype
    x_bytes = jnp.dtype(out_dtype).itemsize

    # ---- Generation-aware budgets (128 MiB VMEM on v5e/v6e, 64 MiB per TC on v7x) ----
    cap = _tpu_vmem_capacity_bytes()
    budget = (cap * 5) // 8                         # ~80 MiB v5e/v6e, ~40 MiB v7x
    vmem_limit = int(min((cap * 7) // 8, budget + (16 << 20)))
    tm_max = 512 if cap >= (96 << 20) else 256

    # ---- Tile selection ----
    tn = _largest_divisor_tile(np_, tuple(c for c in (512, 256, 128) if c <= tn_max))
    tm = _pick_tm(m, tm_max)
    mp = _round_up(m, tm)

    # Decode-style single-tile grid: split N so the "parallel" N axis can shard
    # across v7x's 2 TensorCores (one extra ~0.35us step elsewhere — negligible).
    if mp // tm == 1 and np_ // tn == 1 and tn >= 256:
        tn //= 2

    # ---- Path choice: fully fused K vs. K-reduction grid axis ----
    k_chunk = _pick_k_chunk(kp, k_chunk_pref)
    use_fused = (kp <= k_fuse_max
                 and _fused_vmem_bytes(tm, tn, kp, x_bytes, k_chunk) <= budget)

    if not use_fused:
        tk = _largest_divisor_tile(
            kp, tuple(c for c in (2048, 1024, 512, 256, 128) if c <= tk_max))
        while tk > 128 and _kred_vmem_bytes(
                tm, tn, tk, x_bytes, _pick_k_chunk(tk, k_chunk_pref)) > budget:
            tk //= 2
        while tm > 16 and _kred_vmem_bytes(
                tm, tn, tk, x_bytes, _pick_k_chunk(tk, k_chunk_pref)) > budget:
            tm = max(16, _round_up(tm // 2, 16))
        mp = _round_up(m, tm)
        k_chunk = _pick_k_chunk(tk, k_chunk_pref)

    # ---- Pad activations only when actually needed (zero padding is exact) ----
    if mp != m or kp != k_features:
        x2 = jnp.pad(x2, ((0, mp - m), (0, kp - k_features)))

    if use_fused:
        kernel = functools.partial(_int8_linear_fused_kernel, k_chunk=k_chunk)
        out2 = pl.pallas_call(
            kernel,
            out_shape=jax.ShapeDtypeStruct((mp, np_), out_dtype),
            grid_spec=pltpu.PrefetchScalarGridSpec(
                num_scalar_prefetch=0,
                grid=(mp // tm, np_ // tn),
                in_specs=[
                    pl.BlockSpec((tm, kp), lambda i, j: (i, 0)),   # activations
                    pl.BlockSpec((kp, tn), lambda i, j: (0, j)),   # int8 weights [K,N]
                    pl.BlockSpec((1, tn), lambda i, j: (0, j)),    # scales
                ],
                out_specs=pl.BlockSpec((tm, tn), lambda i, j: (i, j)),
            ),
            compiler_params=pltpu.CompilerParams(
                dimension_semantics=("parallel", "parallel"),
                vmem_limit_bytes=vmem_limit,
            ),
        )(x2, w_kn, scales_row)
    else:
        kernel = functools.partial(_int8_linear_kred_kernel, k_chunk=k_chunk)
        out2 = pl.pallas_call(
            kernel,
            out_shape=jax.ShapeDtypeStruct((mp, np_), out_dtype),
            grid_spec=pltpu.PrefetchScalarGridSpec(
                num_scalar_prefetch=0,
                grid=(mp // tm, np_ // tn, kp // tk),
                in_specs=[
                    pl.BlockSpec((tm, tk), lambda i, j, k: (i, k)),   # activations
                    pl.BlockSpec((tk, tn), lambda i, j, k: (k, j)),   # int8 weights [K,N]
                    pl.BlockSpec((1, tn), lambda i, j, k: (0, j)),    # scales
                ],
                out_specs=pl.BlockSpec((tm, tn), lambda i, j, k: (i, j)),
                scratch_shapes=[pltpu.VMEM((tm, tn), jnp.float32)],
            ),
            compiler_params=pltpu.CompilerParams(
                dimension_semantics=("parallel", "parallel", "arbitrary"),
                vmem_limit_bytes=vmem_limit,
            ),
        )(x2, w_kn, scales_row)

    if mp != m or np_ != n_features:
        out2 = out2[:m, :n_features]
    return out2.reshape(*lead, n_features)


def weight_only_int8_linear_from_module_layout(x, weight_int8, scales, **kwargs):
    """Accepts the PyTorch module's [N, K] int8 weight directly.

    NOTE: re-prepares (transposes + pads) the weight every call; in a real model call
    prepare_weight_only_int8 once at load time and pass the result to
    weight_only_int8_linear instead.
    """
    return weight_only_int8_linear(x, prepare_weight_only_int8(weight_int8, scales), **kwargs)


# --------------------------------------------------------------------------- test
if __name__ == "__main__":
    key = jax.random.PRNGKey(0)
    k_x, k_w, k_s, k_x2, k_w2, k_s2 = jax.random.split(key, 6)

    # Case 1: aligned small shapes (fused path), weight prepared once at "load time".
    batch, seq = 2, 8
    in_features, out_features = 256, 256
    weight_int8 = jax.random.randint(
        k_w, (out_features, in_features), minval=-128, maxval=128, dtype=jnp.int32
    ).astype(jnp.int8)
    scales = jax.random.uniform(
        k_s, (out_features,), minval=0.5, maxval=1.5).astype(jnp.bfloat16)
    x = jax.random.normal(k_x, (batch, seq, in_features)).astype(jnp.bfloat16)

    prepared = prepare_weight_only_int8(weight_int8, scales)  # once, not per forward

    ref = (jnp.einsum("bsk,nk->bsn", x.astype(jnp.float32),
                      weight_int8.astype(jnp.float32))
           * scales.astype(jnp.float32))
    ref_max = jnp.max(jnp.abs(ref)) + 1e-6

    out_fused = jax.block_until_ready(weight_only_int8_linear(x, prepared))
    assert out_fused.shape == (batch, seq, out_features)
    assert out_fused.dtype == jnp.bfloat16
    rel_fused = jnp.max(jnp.abs(out_fused.astype(jnp.float32) - ref)) / ref_max
    assert rel_fused < 5e-2, f"fused path relative error too large: {rel_fused}"

    # Case 2: force the K-reduction kernel (tk=128 -> 2 K steps) on the same data.
    out_kred = jax.block_until_ready(
        weight_only_int8_linear(x, prepared, k_fuse_max=0, tk_max=128))
    assert out_kred.shape == (batch, seq, out_features)
    assert out_kred.dtype == jnp.bfloat16
    rel_kred = jnp.max(jnp.abs(out_kred.astype(jnp.float32) - ref)) / ref_max
    assert rel_kred < 5e-2, f"k-reduction path relative error too large: {rel_kred}"

    # Case 3: ragged shapes exercising M/K/N zero-padding + module-layout helper.
    m3, k3, n3 = 3, 200, 96
    w3 = jax.random.randint(
        k_w2, (n3, k3), minval=-128, maxval=128, dtype=jnp.int32).astype(jnp.int8)
    s3 = jax.random.uniform(k_s2, (n3,), minval=0.5, maxval=1.5).astype(jnp.bfloat16)
    x3 = jax.random.normal(k_x2, (m3, k3)).astype(jnp.bfloat16)
    ref3 = (jnp.einsum("mk,nk->mn", x3.astype(jnp.float32), w3.astype(jnp.float32))
            * s3.astype(jnp.float32))
    out3 = jax.block_until_ready(
        weight_only_int8_linear_from_module_layout(x3, w3, s3))
    assert out3.shape == (m3, n3) and out3.dtype == jnp.bfloat16
    rel3 = (jnp.max(jnp.abs(out3.astype(jnp.float32) - ref3))
            / (jnp.max(jnp.abs(ref3)) + 1e-6))
    assert rel3 < 5e-2, f"padded path relative error too large: {rel3}"

    print("KERNEL_OK")
</pallas_src>

<mosaic_0001>
module attributes {stable_mosaic.version = 11 : i64} {
  func.func @_int8_linear_fused_kernel(%arg0: i32, %arg1: i32, %arg2: memref<16x256xbf16, #tpu.memory_space<vmem>>, %arg3: memref<256x128xi8, #tpu.memory_space<vmem>>, %arg4: memref<1x128xbf16, #tpu.memory_space<vmem>>, %arg5: memref<16x128xbf16, #tpu.memory_space<vmem>>) attributes {dimension_semantics = [#tpu.dimension_semantics<parallel>, #tpu.dimension_semantics<parallel>], iteration_bounds = array<i64: 1, 2>, scalar_prefetch = 0 : i64, scratch_operands = 0 : i64, tpu.core_type = #tpu.core_type<tc>, window_params = [{transform_indices = @transform_0, window_bounds = array<i64: 16, 256>}, {transform_indices = @transform_1, window_bounds = array<i64: 256, 128>}, {transform_indices = @transform_2, window_bounds = array<i64: 1, 128>}, {transform_indices = @transform_3, window_bounds = array<i64: 16, 128>}]} {
    %c0 = arith.constant 0 : index
    %c0_0 = arith.constant 0 : index
    %0 = vector.load %arg3[%c0, %c0_0] : memref<256x128xi8, #tpu.memory_space<vmem>>, vector<256x128xi8>
    %1 = arith.sitofp %0 : vector<256x128xi8> to vector<256x128xbf16>
    %c0_1 = arith.constant 0 : index
    %c0_2 = arith.constant 0 : index
    %2 = vector.load %arg2[%c0_1, %c0_2] : memref<16x256xbf16, #tpu.memory_space<vmem>>, vector<16x256xbf16>
    %cst = arith.constant dense<0.000000e+00> : vector<16x128xf32>
    %3 = tpu.matmul %2, %1, %cst {dimension_numbers = #tpu.dot_dimension_numbers<[1], [0], [0], [1], [0, 0, 1, 1], [], []>} : vector<16x256xbf16>, vector<256x128xbf16>, vector<16x128xf32> -> vector<16x128xf32>
    %c0_3 = arith.constant 0 : index
    %c0_4 = arith.constant 0 : index
    %4 = vector.load %arg4[%c0_3, %c0_4] : memref<1x128xbf16, #tpu.memory_space<vmem>>, vector<1x128xbf16>
    %5 = arith.extf %4 : vector<1x128xbf16> to vector<1x128xf32>
    %6 = vector.broadcast %5 : vector<1x128xf32> to vector<16x128xf32>
    %7 = arith.mulf %3, %6 : vector<16x128xf32>
    %8 = arith.truncf %7 : vector<16x128xf32> to vector<16x128xbf16>
    %c0_5 = arith.constant 0 : index
    %c0_6 = arith.constant 0 : index
    %9 = vector.load %arg5[%c0_5, %c0_6] : memref<16x128xbf16, #tpu.memory_space<vmem>>, vector<16x128xbf16>
    tpu.vector_store %arg5[%c0_5, %c0_6], %8 {strides = array<i32>} : memref<16x128xbf16, #tpu.memory_space<vmem>>, vector<16x128xbf16>,
    return
  }
  func.func @transform_0(%arg0: i32, %arg1: i32) -> (i32, i32) {
    %c0_i32 = arith.constant 0 : i32
    %c0_i32_0 = arith.constant 0 : i32
    return %arg0, %c0_i32 : i32, i32
  }
  func.func @transform_1(%arg0: i32, %arg1: i32) -> (i32, i32) {
    %c0_i32 = arith.constant 0 : i32
    %c0_i32_0 = arith.constant 0 : i32
    return %c0_i32, %arg1 : i32, i32
  }
  func.func @transform_2(%arg0: i32, %arg1: i32) -> (i32, i32) {
    %c0_i32 = arith.constant 0 : i32
    %c0_i32_0 = arith.constant 0 : i32
    return %c0_i32, %arg1 : i32, i32
  }
  func.func @transform_3(%arg0: i32, %arg1: i32) -> (i32, i32) {
    %c0_i32 = arith.constant 0 : i32
    return %arg0, %arg1 : i32, i32
  }
}

</mosaic_0001>

<llo_original>
// kernel: tpu_custom_call.1
$region0: #{tpu_custom_call.1}
  #allocation0 [shape = 'u32[]', space=smem, size = 0x4, offset = 0x4, fixed_abs, tag = 'smem constant byte address 0x4 - core index']
  #allocation1 [shape = 'u32[144,128]{1,0:T(1,128)}', space=vmem, size = 0x12000, scoped, tag = 'internal scratch']
  %s0 = inlined_call_operand.hbm [shape: bf16[16,256], index: 0, kind: input, shape index: {}]
  %s1 = inlined_call_operand.hbm [shape: s8[256,256], index: 1, kind: input, shape index: {}]
  %s2 = inlined_call_operand.vmem [shape: bf16[1,256], index: 2, kind: input, shape index: {}]
  %s3 = inlined_call_operand.hbm [shape: bf16[16,256], index: 3, kind: output, shape index: {}]
  %s4 = sld [smem:[#allocation0]]
  $region53: #{tpu_custom_call.1} parent=0
    _
  %s6 = ssub.s32 1, %s4
  %s7 = scalar_select 0, %s6, %s4
  $region1: #{tpu_custom_call.1} parent=0
    #allocation2 [shape = 'u8[8192]{0}', space=vmem, size = 0x2000, scoped, tag = 'input window, operand 0, single buffered']
    #allocation3 [shape = 's32[2]{0}', space=sflag, size = 0x8, scoped, tag = 'scoped memory for tpu_custom_call.1']
    #allocation4 [shape = 's32[2]{0}', space=sflag, size = 0x8, scoped, tag = 'scoped memory for tpu_custom_call.1']
    #allocation5 [shape = 'u8[65536]{0}', space=vmem, size = 0x10000, scoped, tag = 'input window, operand 1']
    #allocation6 [shape = 's32[2]{0}', space=sflag, size = 0x8, scoped, tag = 'scoped memory for tpu_custom_call.1']
    #allocation7 [shape = 'u8[8192]{0}', space=vmem, size = 0x2000, scoped, tag = 'output window, operand 0']
    %8 = vsyncpa [#allocation3], 0
    %9 = vsyncpa [#allocation6], 0
    %s10 = scalar_lea.sflag [#allocation6], 1
    %11 = vsyncpa %s10, 0
    %12 = vsyncpa [#allocation4], 0
    %s13 = scalar_lea.sflag [#allocation4], 1
    %14 = vsyncpa %s13, 0
    loop: start=0, step=1, limit=4
    $region2: #{tpu_custom_call.1} parent=1 // loop_pre_header
      _
    $region3: #{tpu_custom_call.1} parent=1 // loop_header
      %s16 = sphi 0, %s20
      %p17 = scmp.ge.s32.totalorder %s16, 4
      %s23 = sphi 0, %s35
      %s24 = sphi 0, %s31
      %s25 = sphi 0, %s23
      %s26 = sphi 0, %s24
      %s27 = sphi 0, %s25
      %s28 = sphi 0, %s26
      %s38 = sphi 0, %s40
      %s41 = sphi 0, %s38
      %s42 = sphi 0, %s41
      %s58 = sphi 0, %s42
      %s64 = sphi 0, %s66
      %s67 = sphi 0, %s64
      %s68 = sphi 0, %s67
      %s84 = sphi 0, %s68
      %s90 = sphi 0, %s92
      %s93 = sphi 0, %s90
      %s94 = sphi 0, %s93
      %s110 = sphi 0, %s94
      %s118 = sphi 0, %s120
      %s121 = sphi 0, %s118
      %s122 = sphi 0, %s121
      %s138 = sphi 0, %s122
    $region4: #{tpu_custom_call.1} parent=1 // loop_header_branch
      %19 = sbr.rel (%p17) target = $region8
    $region5: #{tpu_custom_call.1} parent=1 // loop_body
      %s21 = ssub.s32 %s16, 1
      %s22 = ssub.s32 %s16, 2
      %s29 = sadd.s32 1, %s24
      %p30 = scmp.ge.s32.totalorder %s29, 2
      %s31 = scalar_select %p30, 0, %s29
      %s32 = sadd.s32 1, %s23
      %s33 = scalar_select %p30, %s32, %s23
      %p34 = scmp.ge.s32.totalorder %s33, 1
      %s35 = scalar_select %p34, 0, %s33
      %s36 = ssub.s32 %s23, %s35
      %p37 = scmp.eq.s32.totalorder %s36, 0
      %s39 = sadd.s32 %s38, 1
      %s40 = scalar_select %p37, %s38, %s39
      %p43 = pneg %p37
      %p44 = scmp.eq.s32.totalorder %s16, 1
      %p45 = por %p43, %p44
      %p46 = scmp.ne.s32.totalorder %s38, %s41
      %p47 = scmp.eq.s32.totalorder %s16, 0
      %p48 = por %p46, %p47
      %p49 = scmp.ne.s32.totalorder %s38, %s41
      %p50 = scmp.eq.s32.totalorder %s21, 1
      %p51 = por %p49, %p50
      %p52 = scmp.ne.s32.totalorder %s41, %s42
      %p53 = scmp.eq.s32.totalorder %s21, 0
      %p54 = por %p52, %p53
      %p55 = scmp.ne.s32.totalorder %s41, %s42
      %p56 = scmp.eq.s32.totalorder %s22, 1
      %p57 = por %p55, %p56
      %p59 = scmp.ne.s32.totalorder %s42, %s58
      %p60 = scmp.eq.s32.totalorder %s22, 0
      %p61 = por %p59, %p60
      %s62 = ssub.s32 %s24, %s31
      %p63 = scmp.eq.s32.totalorder %s62, 0
      %s65 = sadd.s32 %s64, 1
      %s66 = scalar_select %p63, %s64, %s65
      %p69 = pneg %p63
      %p70 = scmp.eq.s32.totalorder %s16, 1
      %p71 = por %p69, %p70
      %p72 = scmp.ne.s32.totalorder %s64, %s67
      %p73 = scmp.eq.s32.totalorder %s16, 0
      %p74 = por %p72, %p73
      %p75 = scmp.ne.s32.totalorder %s64, %s67
      %p76 = scmp.eq.s32.totalorder %s21, 1
      %p77 = por %p75, %p76
      %p78 = scmp.ne.s32.totalorder %s67, %s68
      %p79 = scmp.eq.s32.totalorder %s21, 0
      %p80 = por %p78, %p79
      %p81 = scmp.ne.s32.totalorder %s67, %s68
      %p82 = scmp.eq.s32.totalorder %s22, 1
      %p83 = por %p81, %p82
      %p85 = scmp.ne.s32.totalorder %s68, %s84
      %p86 = scmp.eq.s32.totalorder %s22, 0
      %p87 = por %p85, %p86
      %s88 = ssub.s32 %s24, %s31
      %p89 = scmp.eq.s32.totalorder %s88, 0
      %s91 = sadd.s32 %s90, 1
      %s92 = scalar_select %p89, %s90, %s91
      %p95 = pneg %p89
      %p96 = scmp.eq.s32.totalorder %s16, 1
      %p97 = por %p95, %p96
      %p98 = scmp.ne.s32.totalorder %s90, %s93
      %p99 = scmp.eq.s32.totalorder %s16, 0
      %p100 = por %p98, %p99
      %p101 = scmp.ne.s32.totalorder %s90, %s93
      %p102 = scmp.eq.s32.totalorder %s21, 1
      %p103 = por %p101, %p102
      %p104 = scmp.ne.s32.totalorder %s93, %s94
      %p105 = scmp.eq.s32.totalorder %s21, 0
      %p106 = por %p104, %p105
      %p107 = scmp.ne.s32.totalorder %s93, %s94
      %p108 = scmp.eq.s32.totalorder %s22, 1
      %p109 = por %p107, %p108
      %p111 = scmp.ne.s32.totalorder %s94, %s110
      %p112 = scmp.eq.s32.totalorder %s22, 0
      %p113 = por %p111, %p112
      %s114 = ssub.s32 %s23, %s35
      %s115 = ssub.s32 %s24, %s31
      %s116 = sor.u32 %s114, %s115
      %p117 = scmp.eq.s32.totalorder %s116, 0
      %s119 = sadd.s32 %s118, 1
      %s120 = scalar_select %p117, %s118, %s119
      %p123 = pneg %p117
      %p124 = scmp.eq.s32.totalorder %s16, 1
      %p125 = por %p123, %p124
      %p126 = scmp.ne.s32.totalorder %s118, %s121
      %p127 = scmp.eq.s32.totalorder %s16, 0
      %p128 = por %p126, %p127
      %p129 = scmp.ne.s32.totalorder %s118, %s121
      %p130 = scmp.eq.s32.totalorder %s21, 1
      %p131 = por %p129, %p130
      %p132 = scmp.ne.s32.totalorder %s121, %s122
      %p133 = scmp.eq.s32.totalorder %s21, 0
      %p134 = por %p132, %p133
      %p135 = scmp.ne.s32.totalorder %s121, %s122
      %p136 = scmp.eq.s32.totalorder %s22, 1
      %p137 = por %p135, %p136
      %p139 = scmp.ne.s32.totalorder %s122, %s138
      %p140 = scmp.eq.s32.totalorder %s22, 0
      %p141 = por %p139, %p140
      %p142 = scmp.le.s32.totalorder 1, %s16
      %p143 = scmp.lt.s32.totalorder %s16, 3
      %p144 = pnand %p142, %p143
      %p145 = pneg %p144
      // Predicated region
      $region9: #{tpu_custom_call.1} parent=5 // pred_check
        _
      $region10: #{tpu_custom_call.1} parent=5 // pred_check_branch
        %147 = sbr.rel (%p144) target = $region12
      $region11: #{tpu_custom_call.1} parent=5 // pred_region
        %s148 = ssub.s32 %s16, 1
        // Predicated region
        $region13: #{tpu_custom_call.1} parent=11 // pred_check
          %p149 = pneg %p54
        $region14: #{tpu_custom_call.1} parent=11 // pred_check_branch
          %151 = sbr.rel (%p149) target = $region16
        $region15: #{tpu_custom_call.1} parent=11 // pred_region
          %s152 = smul.u32 2, %s25
          %s154 = ssub.s32 256, 256
          %155 = vsyncadd [#allocation3], %s154
          %s156 = smul.addr %s152, 2
          %s157 = smul.addr %s156, 64
          %s158 = scalar_lea.hbm %s0, %s157
          %s159 = sshll.u32 [#allocation2], 4
          %s160 = int_to_ptr.vmem [resolvable:$true] %s159
          %165 = dma.hbm_to_vmem [thread:$0]  %s158, 256, %s160, [#allocation3], 128, 128, 8
        $region16: #{tpu_custom_call.1} parent=11 // pred_fallthru
          _
      $region12: #{tpu_custom_call.1} parent=5 // pred_fallthru
        _
      %p166 = scmp.lt.s32.totalorder %s16, 2
      // Predicated region
      $region17: #{tpu_custom_call.1} parent=5 // pred_check
        %p167 = pneg %p166
      $region18: #{tpu_custom_call.1} parent=5 // pred_check_branch
        %169 = sbr.rel (%p167) target = $region20
      $region19: #{tpu_custom_call.1} parent=5 // pred_region
        // Predicated region
        $region21: #{tpu_custom_call.1} parent=19 // pred_check
          %p170 = pneg %p74
        $region22: #{tpu_custom_call.1} parent=19 // pred_check_branch
          %172 = sbr.rel (%p170) target = $region24
        $region23: #{tpu_custom_call.1} parent=19 // pred_region
          %s173 = sand.u32 %s64, 1
          %s174 = scalar_lea.sflag [#allocation6], %s173
          %s175 = sand.u32 %s64, 1
          %s176 = smul.addr %s175, 64
          %s177 = scalar_lea.vmem [#allocation5], %s176
          %s179 = ssub.s32 1024, 1024
          %180 = vsyncadd %s174, %s179
          %s181 = smul.addr %s24, 128
          %s182 = scalar_lea.hbm %s1, %s181
          %s183 = sshll.u32 %s177, 4
          %s184 = int_to_ptr.vmem [resolvable:$true] %s183
          %189 = dma.hbm_to_vmem [thread:$0]  %s182, 1024, %s184, %s174, 256, 128, 8
        $region24: #{tpu_custom_call.1} parent=19 // pred_fallthru
          _
        // Predicated region
        $region25: #{tpu_custom_call.1} parent=19 // pred_check
          %p190 = pneg %p100
        $region26: #{tpu_custom_call.1} parent=19 // pred_check_branch
          %192 = sbr.rel (%p190) target = $region28
        $region27: #{tpu_custom_call.1} parent=19 // pred_region
          %p193 = scmp.lt.s32.totalorder %s24, 1
          %s194 = scalar_select %p193, %s24, 1
          %s195 = scalar_lea.vmem %s2, %s194
        $region28: #{tpu_custom_call.1} parent=19 // pred_fallthru
          _
      $region20: #{tpu_custom_call.1} parent=5 // pred_fallthru
        _
      %p196 = scmp.le.s32.totalorder 1, %s16
      %p197 = scmp.lt.s32.totalorder %s16, 3
      %p198 = pnand %p196, %p197
      %p199 = pneg %p198
      // Predicated region
      $region29: #{tpu_custom_call.1} parent=5 // pred_check
        _
      $region30: #{tpu_custom_call.1} parent=5 // pred_check_branch
        %201 = sbr.rel (%p198) target = $region32
      $region31: #{tpu_custom_call.1} parent=5 // pred_region
        %s202 = ssub.s32 %s16, 1
        // Predicated region
        $region33: #{tpu_custom_call.1} parent=31 // pred_check
          %p203 = pneg %p54
        $region34: #{tpu_custom_call.1} parent=31 // pred_check_branch
          %205 = sbr.rel (%p203) target = $region36
        $region35: #{tpu_custom_call.1} parent=31 // pred_region
          %206 = dma.done [#allocation3], 256
        $region36: #{tpu_custom_call.1} parent=31 // pred_fallthru
          _
        %s207 = sand.u32 %s67, 1
        %s208 = scalar_lea.sflag [#allocation6], %s207
        %s209 = sand.u32 %s67, 1
        %s210 = smul.addr %s209, 64
        %s211 = scalar_lea.vmem [#allocation5], %s210
        // Predicated region
        $region37: #{tpu_custom_call.1} parent=31 // pred_check
          %p212 = pneg %p80
        $region38: #{tpu_custom_call.1} parent=31 // pred_check_branch
          %214 = sbr.rel (%p212) target = $region40
        $region39: #{tpu_custom_call.1} parent=31 // pred_region
          %215 = dma.done %s208, 1024
        $region40: #{tpu_custom_call.1} parent=31 // pred_fallthru
          _
        %p216 = pneg %p54
        %p217 = pneg %p51
        %s218 = sand.u32 %s67, 1
        %s219 = scalar_lea.sflag [#allocation6], %s218
        %s220 = sand.u32 %s67, 1
        %s221 = smul.addr %s220, 64
        %s222 = scalar_lea.vmem [#allocation5], %s221
        %p223 = pneg %p80
        %p224 = pneg %p77
        %p225 = scmp.lt.s32.totalorder %s26, 1
        %s226 = scalar_select %p225, %s26, 1
        %s227 = scalar_lea.vmem %s2, %s226
        %p228 = pneg %p106
        %p229 = pneg %p103
        %p230 = pneg %p134
        %p231 = pneg %p131
        %s232 = sand.u32 %s121, 1
        %s233 = scalar_lea.sflag [#allocation4], %s232
        %s234 = sand.u32 %s121, 1
        %s235 = smul.addr %s234, 8
        %s236 = scalar_lea.vmem [#allocation7], %s235
        %s237 = smul.u32 2, %s25
        %p238 = scmp.lt.s32.totalorder %s26, 1
        %s239 = scalar_select %p238, %s26, 1
        %s240 = scalar_lea.vmem %s2, %s239
        %s241 = smul.u32 2, %s25
        %v243 = vld [vmem:[%s211] sm:$0xff]
        %v244 = vld [vmem:[%s211 + $0x8] sm:$0xff]
        %v245 = vld [vmem:[%s211 + $0x10] sm:$0xff]
        %v246 = vld [vmem:[%s211 + $0x18] sm:$0xff]
        %v247 = vld [vmem:[%s211 + $0x20] sm:$0xff]
        %v248 = vld [vmem:[%s211 + $0x28] sm:$0xff]
        %v249 = vld [vmem:[%s211 + $0x30] sm:$0xff]
        %v250 = vld [vmem:[%s211 + $0x38] sm:$0xff]
        %v251 = vunpack.c.l.s8.bf16 %v243
        %v252 = vunpack.c.h.s8.bf16 %v243
        %v253 = vunpack.c.l.s8.bf16 %v244
        %v254 = vunpack.c.h.s8.bf16 %v244
        %v255 = vunpack.c.l.s8.bf16 %v245
        %v256 = vunpack.c.h.s8.bf16 %v245
        %v257 = vunpack.c.l.s8.bf16 %v246
        %v258 = vunpack.c.h.s8.bf16 %v246
        %v259 = vunpack.c.l.s8.bf16 %v247
        %v260 = vunpack.c.h.s8.bf16 %v247
        %v261 = vunpack.c.l.s8.bf16 %v248
        %v262 = vunpack.c.h.s8.bf16 %v248
        %v263 = vunpack.c.l.s8.bf16 %v249
        %v264 = vunpack.c.h.s8.bf16 %v249
        %v265 = vunpack.c.l.s8.bf16 %v250
        %v266 = vunpack.c.h.s8.bf16 %v250
        %v267 = vld [vmem:[#allocation2] sm:$0xff]
        %v268 = vld [vmem:[#allocation2 + $0x8] sm:$0xff]
        %v271 = vunpack.c.l.b16 %v267
        %v272 = vunpack.c.h.b16 %v267
        %v273 = vunpack.c.l.b16 %v268
        %v274 = vunpack.c.h.b16 %v268
        %v275 = vpack.c.b16 %v273, %v271
        %v276 = vpack.c.b16 %v274, %v272
        %279 = vmatprep.subr.bf16.mxu0 0
        %280 = vmatpush1.bf16.msra.mxu0 %v251
        %281 = vmatprep.subr.bf16.mxu0 0
        %282 = vmatpush1.bf16.msra.mxu0 %v252
        %283 = vmatprep.subr.bf16.mxu0 0
        %284 = vmatpush1.bf16.msra.mxu0 %v253
        %285 = vmatprep.subr.bf16.mxu0 0
        %286 = vmatpush1.bf16.msra.mxu0 %v254
        %287 = vmatprep.subr.bf16.mxu0 0
        %288 = vmatpush1.bf16.msra.mxu0 %v255
        %289 = vmatprep.subr.bf16.mxu0 0
        %290 = vmatpush1.bf16.msra.mxu0 %v256
        %291 = vmatprep.subr.bf16.mxu0 0
        %292 = vmatpush1.bf16.msra.mxu0 %v257
        %293 = vmatprep.subr.bf16.mxu0 0
        %294 = vmatpush1.bf16.msra.mxu0 %v258
        %295 = vmatprep.subr.bf16.mxu0 0
        %296 = vmatpush1.bf16.msra.mxu0 %v259
        %297 = vmatprep.subr.bf16.mxu0 0
        %298 = vmatpush1.bf16.msra.mxu0 %v260
        %299 = vmatprep.subr.bf16.mxu0 0
        %300 = vmatpush1.bf16.msra.mxu0 %v261
        %301 = vmatprep.subr.bf16.mxu0 0
        %302 = vmatpush1.bf16.msra.mxu0 %v262
        %303 = vmatprep.subr.bf16.mxu0 0
        %304 = vmatpush1.bf16.msra.mxu0 %v263
        %305 = vmatprep.subr.bf16.mxu0 0
        %306 = vmatpush1.bf16.msra.mxu0 %v264
        %307 = vmatprep.subr.bf16.mxu0 0
        %308 = vmatpush1.bf16.msra.mxu0 %v265
        %309 = vmatprep.subr.bf16.mxu0 0
        %310 = vmatpush1.bf16.msra.mxu0 %v266
        %311 = vmatprep.mubr.bf16.mxu0 %v276
        %312 = vmatmul.mubr.bf16.gmra.mrb[0].mxu0 %v275
        %v313 = vpop.f32.mrb[0].mxu0
        %v314 = vadd.f32 0.0, %v313
        %v315 = vpop.f32.mrb[0].mxu0
        %v316 = vpop.f32.mrb[0].mxu0
        %v317 = vadd.f32 0.0, %v316
        %v318 = vpop.f32.mrb[0].mxu0
        %319 = vdwg.mxu0
        %v320 = vld [vmem:[%s240] sm:$0x1]
        %v321 = vunpack.c.l.bf16 %v320
        %v322 = vlaneseq
        %v323 = vshrl.u32 %v322, 7
        %v324 = vsub.s32 0, %v323
        %v325 = vrot.slane %v321, %v324
        %v326 = vmul.f32 %v314, %v325
        %v327 = vmul.f32 %v317, %v325
        %v328 = vpack.c.bf16 %v327, %v326
        %v330 = vunpack.c.l.b16 %v328
        %v331 = vunpack.c.h.b16 %v328
        %v332 = vpack.c.b16 %v330, %v330
        %v333 = vpack.c.b16 %v331, %v331
        %336 = vst [vmem:[%s236] sm:$0xf] %v332
        %337 = vst [vmem:[%s236 + $0x4] sm:$0xf] %v333
        %s338 = sand.u32 %s121, 1
        %s339 = scalar_lea.sflag [#allocation4], %s338
        %s340 = sand.u32 %s121, 1
        %s341 = smul.addr %s340, 8
        %s342 = scalar_lea.vmem [#allocation7], %s341
        // Predicated region
        $region41: #{tpu_custom_call.1} parent=31 // pred_check
          %p343 = pneg %p131
        $region42: #{tpu_custom_call.1} parent=31 // pred_check_branch
          %345 = sbr.rel (%p343) target = $region44
        $region43: #{tpu_custom_call.1} parent=31 // pred_region
          %s346 = smul.u32 2, %s25
          %s348 = ssub.s32 128, 128
          %349 = vsyncadd %s339, %s348
          %s350 = smul.addr %s346, 2
          %s351 = sadd.s32 %s26, %s350
          %s352 = smul.addr %s351, 64
          %s353 = scalar_lea.hbm %s3, %s352
          %s354 = sshll.u32 %s342, 4
          %s355 = int_to_ptr.vmem [resolvable:$true] %s354
          %360 = dma.vmem_to_hbm [thread:$0]  %s355, 128, %s353, %s339, 64, 128, 4
        $region44: #{tpu_custom_call.1} parent=31 // pred_fallthru
          _
      $region32: #{tpu_custom_call.1} parent=5 // pred_fallthru
        _
      %p361 = scmp.le.s32.totalorder 2, %s16
      // Predicated region
      $region45: #{tpu_custom_call.1} parent=5 // pred_check
        %p362 = pneg %p361
      $region46: #{tpu_custom_call.1} parent=5 // pred_check_branch
        %364 = sbr.rel (%p362) target = $region48
      $region47: #{tpu_custom_call.1} parent=5 // pred_region
        %s365 = ssub.s32 %s16, 2
        // Predicated region
        $region49: #{tpu_custom_call.1} parent=47 // pred_check
          %p366 = pneg %p137
        $region50: #{tpu_custom_call.1} parent=47 // pred_check_branch
          %368 = sbr.rel (%p366) target = $region52
        $region51: #{tpu_custom_call.1} parent=47 // pred_region
          %s369 = sand.u32 %s122, 1
          %s370 = scalar_lea.sflag [#allocation4], %s369
          %s371 = sand.u32 %s122, 1
          %s372 = smul.addr %s371, 8
          %s373 = scalar_lea.vmem [#allocation7], %s372
          %374 = dma.done %s370, 128
        $region52: #{tpu_custom_call.1} parent=47 // pred_fallthru
          _
      $region48: #{tpu_custom_call.1} parent=5 // pred_fallthru
        _
    $region6: #{tpu_custom_call.1} parent=1 // loop_footer
      %s20 = sadd.s32 1, %s16
    $region7: #{tpu_custom_call.1} parent=1 // loop_footer_branch
      %15 = sbr.rel target = $region3
    $region8: #{tpu_custom_call.1} parent=1 // loop_exit
      _
    %375 = vsyncpa [#allocation3], 1
    %s376 = scalar_lea.sflag [#allocation3], 1
    %377 = vsyncpa %s376, 1
    %378 = vsyncpa [#allocation6], 1
    %s379 = scalar_lea.sflag [#allocation6], 1
    %380 = vsyncpa %s379, 1
    %381 = vsyncpa [#allocation4], 1
    %s382 = scalar_lea.sflag [#allocation4], 1
    %383 = vsyncpa %s382, 1

</llo_original>
